<compile_context>
chip_gen: v6e
topology: v6e:2x2x1
jax: 0.10.0
libtpu: 0.0.40
codegen_flags: <defaults>
</compile_context>

<pallas_src>
import functools

import jax
import jax.numpy as jnp
from jax import lax
from jax.experimental import pallas as pl
from jax.experimental.pallas import tpu as pltpu

EPS = 1e-5
NEG_SLOPE = 0.01  # torch.nn.functional.leaky_relu default


def _disc_node_kernel(wt_ref, pt_ref, params_ref, o_ref, acc_ref):
  # wt_ref:     [Cout, TK]   bf16 (transposed, reshaped conv weight slice)
  # pt_ref:     [TK, TM]     bf16 (transposed im2col patch slice)
  # params_ref: [Cout, 3]    f32  (col 0: conv bias, col 1: gamma, col 2: beta)
  # o_ref:      [Cout, TM]   f32  (lane-dense output tile)
  # acc_ref:    [Cout, TM]   f32  (K-contraction accumulator scratch)
  k_idx = pl.program_id(1)

  @pl.when(k_idx == 0)
  def _():
    acc_ref[...] = jnp.zeros_like(acc_ref)

  acc_ref[...] += jnp.dot(wt_ref[...], pt_ref[...],
                          preferred_element_type=jnp.float32)

  @pl.when(k_idx == pl.num_programs(1) - 1)
  def _():
    params = params_ref[...]
    b = params[:, 0:1]                                  # [Cout, 1]
    g = params[:, 1:2]
    be = params[:, 2:3]
    y = acc_ref[...] + b                                # conv bias, f32
    # LayerNorm over the Cout (sublane) axis -> cheap sublane reduce.
    mean = jnp.mean(y, axis=0, keepdims=True)           # [1, TM]
    diff = y - mean
    var = jnp.mean(diff * diff, axis=0, keepdims=True)
    yhat = diff * lax.rsqrt(var + EPS)
    z = yhat * g + be
    o_ref[...] = jnp.where(z >= 0, z, NEG_SLOPE * z).astype(o_ref.dtype)


def _im2col_3d_t(x, kernel, stride):
  """x: [N, Cin, D, H, W] -> transposed patches [Cin*kd*kh*kw, N*Do*Ho*Wo].

  K-axis feature order is (Cin, kd, kh, kw) to match torch's OIDHW weight
  layout; M-axis order is (N, Do, Ho, Wo).
  """
  n, c, d, h, w = x.shape
  kd, kh, kw = kernel
  sd, sh, sw = stride
  do = (d - kd) // sd + 1
  ho = (h - kh) // sh + 1
  wo = (w - kw) // sw + 1
  cols = []
  for dz in range(kd):
    for dy in range(kh):
      for dx in range(kw):
        cols.append(
            x[:, :, dz:dz + sd * do:sd, dy:dy + sh * ho:sh, dx:dx + sw * wo:sw])
  p = jnp.stack(cols, axis=2)                  # [N, Cin, kd*kh*kw, Do, Ho, Wo]
  p = jnp.transpose(p, (1, 2, 0, 3, 4, 5))     # [Cin, K3, N, Do, Ho, Wo]
  p = p.reshape(c * kd * kh * kw, n * do * ho * wo)
  return p, (do, ho, wo)


def _round_up(a, b):
  return -(-a // b) * b


@functools.partial(jax.jit, static_argnames=("kernel", "stride"))
def discriminator_node(x, weight, bias, gamma, beta, *, kernel, stride):
  """x: [N, Cin, D, H, W] (NCDHW), weight: [Cout, Cin, kd, kh, kw] (torch OIDHW)."""
  n, cin, _, _, _ = x.shape
  cout = weight.shape[0]
  kd, kh, kw = kernel

  # bf16 cast BEFORE im2col so the materialized patches array is half-size.
  x_bf = x.astype(jnp.bfloat16)
  pt, (do, ho, wo) = _im2col_3d_t(x_bf, kernel, stride)      # [K, M] bf16
  k = cin * kd * kh * kw
  m = n * do * ho * wo

  # --- tile selection -------------------------------------------------------
  # TM: large lane-dense tile; don't overshoot small M by more than one tile.
  tm = 512 if m >= 512 else _round_up(m, 128)
  m_pad = _round_up(m, tm)
  # TK: single full-K block when small; otherwise 512-wide K tiles (mult. of 128).
  if k <= 1024:
    tk, k_pad = k, k
  else:
    tk = 512
    k_pad = _round_up(k, tk)

  wt = weight.reshape(cout, k).astype(jnp.bfloat16)          # [Cout, K]
  if k_pad != k:
    wt = jnp.pad(wt, ((0, 0), (0, k_pad - k)))
  if (m_pad != m) or (k_pad != k):
    pt = jnp.pad(pt, ((0, k_pad - k), (0, m_pad - m)))

  # Fuse bias/gamma/beta into one small resident block.
  params = jnp.stack([bias, gamma, beta], axis=1).astype(jnp.float32)  # [Cout, 3]

  num_m = m_pad // tm
  num_k = k_pad // tk

  flops = 2 * m_pad * k_pad * cout
  bytes_accessed = (pt.size * pt.dtype.itemsize
                    + wt.size * wt.dtype.itemsize
                    + params.size * 4
                    + cout * m_pad * 4)

  out = pl.pallas_call(
      _disc_node_kernel,
      out_shape=jax.ShapeDtypeStruct((cout, m_pad), jnp.float32),
      grid_spec=pltpu.PrefetchScalarGridSpec(
          num_scalar_prefetch=0,
          grid=(num_m, num_k),
          in_specs=[
              pl.BlockSpec((cout, tk), lambda i, kk: (0, kk)),   # W^T
              pl.BlockSpec((tk, tm), lambda i, kk: (kk, i)),     # P^T
              pl.BlockSpec((cout, 3), lambda i, kk: (0, 0)),     # fused params
          ],
          out_specs=pl.BlockSpec((cout, tm), lambda i, kk: (0, i)),
          scratch_shapes=[pltpu.VMEM((cout, tm), jnp.float32)],
      ),
      compiler_params=pltpu.CompilerParams(
          dimension_semantics=("parallel", "arbitrary"),
          vmem_limit_bytes=64 * 1024 * 1024),
      cost_estimate=pl.CostEstimate(
          flops=flops, transcendentals=m_pad, bytes_accessed=bytes_accessed),
  )(wt, pt, params)

  # [Cout, M] is already channels-first: cheap transpose back to NCDHW.
  out = out[:, :m].reshape(cout, n, do, ho, wo)
  return jnp.transpose(out, (1, 0, 2, 3, 4))


def _reference(x, weight, bias, gamma, beta, kernel, stride):
  y = lax.conv_general_dilated(
      x, weight, window_strides=stride, padding="VALID",
      dimension_numbers=("NCDHW", "OIDHW", "NCDHW"))
  y = y + bias[None, :, None, None, None]
  mean = jnp.mean(y, axis=1, keepdims=True)
  var = jnp.mean((y - mean) ** 2, axis=1, keepdims=True)
  yhat = (y - mean) / jnp.sqrt(var + EPS)
  z = yhat * gamma[None, :, None, None, None] + beta[None, :, None, None, None]
  return jnp.where(z >= 0, z, NEG_SLOPE * z)


if __name__ == "__main__":
  # Small shapes: batch=2, in_dim=4, out_dim=8, spatial=8^3, kernel=3, stride=2.
  N, CIN, COUT = 2, 4, 8
  D = H = W = 8
  KERNEL = (3, 3, 3)
  STRIDE = (2, 2, 2)

  key = jax.random.PRNGKey(0)
  kx, kw_, kb, kg, kbe = jax.random.split(key, 5)
  x = jax.random.normal(kx, (N, CIN, D, H, W), dtype=jnp.float32)
  weight = 0.1 * jax.random.normal(kw_, (COUT, CIN) + KERNEL, dtype=jnp.float32)
  bias = 0.1 * jax.random.normal(kb, (COUT,), dtype=jnp.float32)
  gamma = 1.0 + 0.1 * jax.random.normal(kg, (COUT,), dtype=jnp.float32)
  beta = 0.1 * jax.random.normal(kbe, (COUT,), dtype=jnp.float32)

  out = discriminator_node(x, weight, bias, gamma, beta,
                           kernel=KERNEL, stride=STRIDE)
  out = jax.block_until_ready(out)

  ref = _reference(x, weight, bias, gamma, beta, KERNEL, STRIDE)
  assert out.shape == ref.shape, (out.shape, ref.shape)
  # bf16 matmul inputs -> loosen tolerance (LayerNorm over 8 channels can
  # amplify the ~1e-3 bf16 conv error); check both max-abs and relative L2.
  max_abs = jnp.max(jnp.abs(out - ref))
  rel_l2 = jnp.linalg.norm(out - ref) / (jnp.linalg.norm(ref) + 1e-12)
  assert max_abs < 1e-1, max_abs
  assert rel_l2 < 2e-2, rel_l2

  print("KERNEL_OK")
</pallas_src>

<mosaic_0001>
module attributes {stable_mosaic.version = 11 : i64} {
  func.func @_disc_node_kernel(%arg0: i32, %arg1: i32, %arg2: memref<8x108xbf16, #tpu.memory_space<vmem>>, %arg3: memref<108x128xbf16, #tpu.memory_space<vmem>>, %arg4: memref<8x3xf32, #tpu.memory_space<vmem>>, %arg5: memref<8x128xf32, #tpu.memory_space<vmem>>, %arg6: memref<8x128xf32, #tpu.memory_space<vmem>>) attributes {dimension_semantics = [#tpu.dimension_semantics<parallel>, #tpu.dimension_semantics<arbitrary>], iteration_bounds = array<i64: 1, 1>, scalar_prefetch = 0 : i64, scratch_operands = 1 : i64, tpu.core_type = #tpu.core_type<tc>, window_params = [{transform_indices = @transform_0, window_bounds = array<i64: 8, 108>}, {transform_indices = @transform_1, window_bounds = array<i64: 108, 128>}, {pipeline_mode = #tpu.pipeline_mode<synchronous>, transform_indices = @transform_2, window_bounds = array<i64: 8, 3>}, {transform_indices = @transform_3, window_bounds = array<i64: 8, 128>}]} {
    %c0_i32 = arith.constant 0 : i32
    %0 = arith.cmpi eq, %arg1, %c0_i32 : i32
    %1 = arith.extui %0 : i1 to i32
    %c0_i32_0 = arith.constant 0 : i32
    %2 = arith.cmpi ne, %1, %c0_i32_0 : i32
    scf.if %2 {
      %cst_10 = arith.constant 0.000000e+00 : f32
      %12 = vector.broadcast %cst_10 : f32 to vector<8x128xf32>
      %c0_11 = arith.constant 0 : index
      %c0_12 = arith.constant 0 : index
      %13 = vector.load %arg6[%c0_11, %c0_12] : memref<8x128xf32, #tpu.memory_space<vmem>>, vector<8x128xf32>
      tpu.vector_store %arg6[%c0_11, %c0_12], %12 {strides = array<i32>} : memref<8x128xf32, #tpu.memory_space<vmem>>, vector<8x128xf32>,
    } else {
    }
    %c0 = arith.constant 0 : index
    %c0_1 = arith.constant 0 : index
    %3 = vector.load %arg6[%c0, %c0_1] : memref<8x128xf32, #tpu.memory_space<vmem>>, vector<8x128xf32>
    %c0_2 = arith.constant 0 : index
    %c0_3 = arith.constant 0 : index
    %4 = vector.load %arg2[%c0_2, %c0_3] : memref<8x108xbf16, #tpu.memory_space<vmem>>, vector<8x108xbf16>
    %c0_4 = arith.constant 0 : index
    %c0_5 = arith.constant 0 : index
    %5 = vector.load %arg3[%c0_4, %c0_5] : memref<108x128xbf16, #tpu.memory_space<vmem>>, vector<108x128xbf16>
    %cst = arith.constant dense<0.000000e+00> : vector<8x128xf32>
    %6 = tpu.matmul %4, %5, %cst {dimension_numbers = #tpu.dot_dimension_numbers<[1], [0], [0], [1], [0, 0, 1, 1], [], []>} : vector<8x108xbf16>, vector<108x128xbf16>, vector<8x128xf32> -> vector<8x128xf32>
    %7 = arith.addf %3, %6 : vector<8x128xf32>
    %c0_6 = arith.constant 0 : index
    %c0_7 = arith.constant 0 : index
    %8 = vector.load %arg6[%c0_6, %c0_7] : memref<8x128xf32, #tpu.memory_space<vmem>>, vector<8x128xf32>
    tpu.vector_store %arg6[%c0_6, %c0_7], %7 {strides = array<i32>} : memref<8x128xf32, #tpu.memory_space<vmem>>, vector<8x128xf32>,
    %c0_i32_8 = arith.constant 0 : i32
    %9 = arith.cmpi eq, %arg1, %c0_i32_8 : i32
    %10 = arith.extui %9 : i1 to i32
    %c0_i32_9 = arith.constant 0 : i32
    %11 = arith.cmpi ne, %10, %c0_i32_9 : i32
    scf.if %11 {
      %c0_10 = arith.constant 0 : index
      %c0_11 = arith.constant 0 : index
      %12 = vector.load %arg4[%c0_10, %c0_11] : memref<8x3xf32, #tpu.memory_space<vmem>>, vector<8x3xf32>
      %13 = vector.extract_strided_slice %12 {offsets = [0, 0], sizes = [8, 1], strides = [1, 1]} : vector<8x3xf32> to vector<8x1xf32>
      %14 = vector.extract_strided_slice %12 {offsets = [0, 1], sizes = [8, 1], strides = [1, 1]} : vector<8x3xf32> to vector<8x1xf32>
      %15 = vector.extract_strided_slice %12 {offsets = [0, 2], sizes = [8, 1], strides = [1, 1]} : vector<8x3xf32> to vector<8x1xf32>
      %c0_12 = arith.constant 0 : index
      %c0_13 = arith.constant 0 : index
      %16 = vector.load %arg6[%c0_12, %c0_13] : memref<8x128xf32, #tpu.memory_space<vmem>>, vector<8x128xf32>
      %17 = vector.broadcast %13 : vector<8x1xf32> to vector<8x128xf32>
      %18 = arith.addf %16, %17 : vector<8x128xf32>
      %cst_14 = arith.constant dense<0.000000e+00> : vector<128xf32>
      %19 = vector.multi_reduction <add>, %18, %cst_14 [0] : vector<8x128xf32> to vector<128xf32>
      %20 = vector.shape_cast %19 : vector<128xf32> to vector<1x128xf32>
      %cst_15 = arith.constant 8.000000e+00 : f32
      %21 = vector.broadcast %cst_15 : f32 to vector<1x128xf32>
      %22 = arith.divf %20, %21 : vector<1x128xf32>
      %23 = vector.broadcast %22 : vector<1x128xf32> to vector<8x128xf32>
      %24 = arith.subf %18, %23 : vector<8x128xf32>
      %25 = arith.mulf %24, %24 : vector<8x128xf32>
      %cst_16 = arith.constant dense<0.000000e+00> : vector<128xf32>
      %26 = vector.multi_reduction <add>, %25, %cst_16 [0] : vector<8x128xf32> to vector<128xf32>
      %27 = vector.shape_cast %26 : vector<128xf32> to vector<1x128xf32>
      %cst_17 = arith.constant 8.000000e+00 : f32
      %28 = vector.broadcast %cst_17 : f32 to vector<1x128xf32>
      %29 = arith.divf %27, %28 : vector<1x128xf32>
      %cst_18 = arith.constant 9.99999974E-6 : f32
      %30 = vector.broadcast %cst_18 : f32 to vector<1x128xf32>
      %31 = arith.addf %29, %30 : vector<1x128xf32>
      %32 = math.rsqrt %31 : vector<1x128xf32>
      %33 = vector.broadcast %32 : vector<1x128xf32> to vector<8x128xf32>
      %34 = arith.mulf %24, %33 : vector<8x128xf32>
      %35 = vector.broadcast %14 : vector<8x1xf32> to vector<8x128xf32>
      %36 = arith.mulf %34, %35 : vector<8x128xf32>
      %37 = vector.broadcast %15 : vector<8x1xf32> to vector<8x128xf32>
      %38 = arith.addf %36, %37 : vector<8x128xf32>
      %cst_19 = arith.constant 0.000000e+00 : f32
      %39 = vector.broadcast %cst_19 : f32 to vector<8x128xf32>
      %40 = arith.cmpf oge, %38, %39 : vector<8x128xf32>
      %cst_20 = arith.constant 0.00999999977 : f32
      %41 = vector.broadcast %cst_20 : f32 to vector<8x128xf32>
      %42 = arith.mulf %41, %38 : vector<8x128xf32>
      %43 = arith.select %40, %38, %42 : vector<8x128xi1>, vector<8x128xf32>
      %c0_21 = arith.constant 0 : index
      %c0_22 = arith.constant 0 : index
      %44 = vector.load %arg5[%c0_21, %c0_22] : memref<8x128xf32, #tpu.memory_space<vmem>>, vector<8x128xf32>
      tpu.vector_store %arg5[%c0_21, %c0_22], %43 {strides = array<i32>} : memref<8x128xf32, #tpu.memory_space<vmem>>, vector<8x128xf32>,
    } else {
    }
    return
  }
  func.func @transform_0(%arg0: i32, %arg1: i32) -> (i32, i32) {
    %c0_i32 = arith.constant 0 : i32
    %c0_i32_0 = arith.constant 0 : i32
    return %c0_i32, %arg1 : i32, i32
  }
  func.func @transform_1(%arg0: i32, %arg1: i32) -> (i32, i32) {
    %c0_i32 = arith.constant 0 : i32
    return %arg1, %arg0 : i32, i32
  }
  func.func @transform_2(%arg0: i32, %arg1: i32) -> (i32, i32) {
    %c0_i32 = arith.constant 0 : i32
    %c0_i32_0 = arith.constant 0 : i32
    %c0_i32_1 = arith.constant 0 : i32
    return %c0_i32, %c0_i32_0 : i32, i32
  }
  func.func @transform_3(%arg0: i32, %arg1: i32) -> (i32, i32) {
    %c0_i32 = arith.constant 0 : i32
    %c0_i32_0 = arith.constant 0 : i32
    return %c0_i32, %arg0 : i32, i32
  }
}

</mosaic_0001>

<llo_original>
// kernel: discriminator_node.1
$region0: #{discriminator_node.1}
  #allocation0 [shape = 'u32[]', space=smem, size = 0x4, offset = 0x4, fixed_abs, tag = 'smem constant byte address 0x4 - core index']
  #allocation1 [shape = 'u32[144,128]{1,0:T(1,128)}', space=vmem, size = 0x12000, scoped, tag = 'internal scratch']
  #allocation2 [shape = 'f32[8,128]{1,0:T(8,128)}', space=vmem, size = 0x1000, scoped, tag = 'scratch operand']
  %s0 = inlined_call_operand.vmem [shape: bf16[8,108], index: 0, kind: input, shape index: {}]
  %s1 = inlined_call_operand.vmem [shape: bf16[108,128], index: 1, kind: input, shape index: {}]
  %s2 = inlined_call_operand.vmem [shape: f32[8,3], index: 2, kind: input, shape index: {}]
  %s3 = inlined_call_operand.vmem [shape: f32[8,128], index: 3, kind: output, shape index: {}]
  %s4 = sld [smem:[#allocation0]]
  $region30: #{discriminator_node.1} parent=0
    _
  %s6 = ssub.s32 1, %s4
  %s7 = scalar_select 0, %s6, %s4
  // Predicated region
  $region2: #{discriminator_node.1} parent=0 // pred_check
    _
  $region3: #{discriminator_node.1} parent=0 // pred_check_branch
    %9 = sbr.rel (0) target = $region5
  $region4: #{discriminator_node.1} parent=0 // pred_region
    _
  $region5: #{discriminator_node.1} parent=0 // pred_fallthru
    _
  // Predicated region
  $region6: #{discriminator_node.1} parent=0 // pred_check
    _
  $region7: #{discriminator_node.1} parent=0 // pred_check_branch
    %11 = sbr.rel (0) target = $region9
  $region8: #{discriminator_node.1} parent=0 // pred_region
    _
  $region9: #{discriminator_node.1} parent=0 // pred_fallthru
    _
  // Predicated region
  $region10: #{discriminator_node.1} parent=0 // pred_check
    _
  $region11: #{discriminator_node.1} parent=0 // pred_check_branch
    %13 = sbr.rel (0) target = $region13
  $region12: #{discriminator_node.1} parent=0 // pred_region
    _
  $region13: #{discriminator_node.1} parent=0 // pred_fallthru
    _
  %p15 = scmp.eq.s32.totalorder 0, 0
  // Predicated region
  $region14: #{discriminator_node.1} parent=0 // pred_check
    %p16 = pneg %p15
  $region15: #{discriminator_node.1} parent=0 // pred_check_branch
    %18 = sbr.rel (%p16) target = $region17
  $region16: #{discriminator_node.1} parent=0 // pred_region
    %19 = vst [vmem:[#allocation2] sm:$0xff] 0.0
  $region17: #{discriminator_node.1} parent=0 // pred_fallthru
    _
  %v20 = vld [vmem:[#allocation2] sm:$0xff]
  %v21 = vld [vmem:[%s0] sm:$0xf]
  %v22 = vld [vmem:[%s1] sm:$0xf]
  %v23 = vld [vmem:[%s1 + $0x4] sm:$0xf]
  %v24 = vld [vmem:[%s1 + $0x8] sm:$0xf]
  %v25 = vld [vmem:[%s1 + $0xc] sm:$0xf]
  %v26 = vld [vmem:[%s1 + $0x10] sm:$0xf]
  %v27 = vld [vmem:[%s1 + $0x14] sm:$0xf]
  %v28 = vld [vmem:[%s1 + $0x18] sm:$0xf]
  %v29 = vld [vmem:[%s1 + $0x1c] sm:$0xf]
  %v30 = vld [vmem:[%s1 + $0x20] sm:$0xf]
  %v31 = vld [vmem:[%s1 + $0x24] sm:$0xf]
  %v32 = vld [vmem:[%s1 + $0x28] sm:$0xf]
  %v33 = vld [vmem:[%s1 + $0x2c] sm:$0xf]
  %v34 = vld [vmem:[%s1 + $0x30] sm:$0xf]
  %v35 = vld [vmem:[%s1 + $0x34] sm:$0x3]
  %v50 = vunpack.c.l.b16 %v22
  %v51 = vunpack.c.l.b16 %v23
  %v52 = vunpack.c.l.b16 %v24
  %v53 = vunpack.c.l.b16 %v25
  %v54 = vunpack.c.l.b16 %v26
  %v55 = vunpack.c.l.b16 %v27
  %v56 = vunpack.c.l.b16 %v28
  %v57 = vunpack.c.l.b16 %v29
  %v58 = vunpack.c.l.b16 %v30
  %v59 = vunpack.c.l.b16 %v31
  %v60 = vunpack.c.l.b16 %v32
  %v61 = vunpack.c.l.b16 %v33
  %v62 = vunpack.c.l.b16 %v34
  %v63 = vunpack.c.l.b16 %v35
  %v64 = vpack.c.b16 %v51, %v50
  %v65 = vpack.c.b16 %v53, %v52
  %v66 = vpack.c.b16 %v55, %v54
  %v67 = vpack.c.b16 %v57, %v56
  %v68 = vpack.c.b16 %v59, %v58
  %v69 = vpack.c.b16 %v61, %v60
  %v70 = vpack.c.b16 %v63, %v62
  %vm77 = vcmask 883712
  %v79 = vsel %vm77, %v21, 0
  %vm81 = vcmask 1045504
  %v83 = vsel %vm81, %v70, 0
  %85 = vmatprep.subr.bf16.mxu0 0
  %86 = vmatpush1.bf16.msra.mxu0 0
  %87 = vmatprep.subr.bf16.mxu0 0
  %88 = vmatpush1.bf16.msra.mxu0 %v83
  %89 = vmatprep.subr.bf16.mxu0 0
  %90 = vmatpush1.bf16.msra.mxu0 %v69
  %91 = vmatprep.subr.bf16.mxu0 0
  %92 = vmatpush1.bf16.msra.mxu0 %v68
  %93 = vmatprep.subr.bf16.mxu0 0
  %94 = vmatpush1.bf16.msra.mxu0 %v67
  %95 = vmatprep.subr.bf16.mxu0 0
  %96 = vmatpush1.bf16.msra.mxu0 %v66
  %97 = vmatprep.subr.bf16.mxu0 0
  %98 = vmatpush1.bf16.msra.mxu0 %v65
  %99 = vmatprep.subr.bf16.mxu0 0
  %100 = vmatpush1.bf16.msra.mxu0 %v64
  %101 = vmatprep.subr.bf16.mxu0 0
  %102 = vmatpush2.bf16.msra.mxu0 0
  %103 = vmatprep.subr.bf16.mxu0 0
  %104 = vmatpush2.bf16.msra.mxu0 0
  %105 = vmatprep.subr.bf16.mxu0 0
  %106 = vmatpush2.bf16.msra.mxu0 0
  %107 = vmatprep.subr.bf16.mxu0 0
  %108 = vmatpush2.bf16.msra.mxu0 0
  %109 = vmatprep.subr.bf16.mxu0 0
  %110 = vmatpush2.bf16.msra.mxu0 0
  %111 = vmatprep.subr.bf16.mxu0 0
  %112 = vmatpush2.bf16.msra.mxu0 0
  %113 = vmatprep.subr.bf16.mxu0 0
  %114 = vmatpush2.bf16.msra.mxu0 0
  %115 = vmatprep.subr.bf16.mxu0 0
  %116 = vmatpush2.bf16.msra.mxu0 0
  %117 = vmatprep.mubr.bf16.mxu0 0
  %118 = vmatmul.mubr.bf16.gmra.mxu0 %v79
  %v119 = vpop.f32.mrf.mxu0
  %v120 = vadd.f32 0.0, %v119
  %v121 = vpop.f32.mrf.mxu0
  %v122 = vpop.f32.mrf.mxu0
  %v123 = vpop.f32.mrf.mxu0
  %124 = vdwg.mxu0
  %v125 = vadd.f32 %v20, %v120
  %126 = vst [vmem:[#allocation2] sm:$0xff] %v125
  // Predicated region
  $region18: #{discriminator_node.1} parent=0 // pred_check
    %p127 = pneg %p15
  $region19: #{discriminator_node.1} parent=0 // pred_check_branch
    %129 = sbr.rel (%p127) target = $region21
  $region20: #{discriminator_node.1} parent=0 // pred_region
    %v130 = vld [vmem:[%s2] sm:$0xff]
    %v131 = vld [vmem:[#allocation2] sm:$0xff]
    %133 = vset.pattern.permute.xlu0 0
    %134 = vperm.xlu0 %133, %v130
    %v135 = vpop.permute.xlu0 %134
    %v137 = vadd.f32 %v131, %v135
    %v138 = vrot.slane %v137, 4
    %v139 = vadd.f32 %v137, %v138
    %v140 = vrot.slane %v139, 2
    %v141 = vadd.f32 %v139, %v140
    %v142 = vrot.slane %v141, 1
    %v143 = vadd.f32 %v141, %v142
    %v144 = vrcp.pop 8.0
    %v145 = vmul.f32 %v143, %v144
    %v146 = vsub.f32 %v137, %v145
    %v147 = vmul.f32 %v146, %v146
    %v148 = vrot.slane %v147, 4
    %v149 = vadd.f32 %v147, %v148
    %v150 = vrot.slane %v149, 2
    %v151 = vadd.f32 %v149, %v150
    %v152 = vrot.slane %v151, 1
    %v153 = vadd.f32 %v151, %v152
    %v154 = vmul.f32 %v153, %v144
    %v155 = vadd.f32 %v154, 1e-05
    %v156 = vrsqrt.pop %v155
    %v157 = vmul.f32 %v146, %v156
    %158 = vset.pattern.permute.xlu0 1
    %159 = vperm.xlu0 %158, %v130
    %v160 = vpop.permute.xlu0 %159
    %v162 = vmul.f32 %v157, %v160
    %163 = vset.pattern.permute.xlu0 2
    %164 = vperm.xlu0 %163, %v130
    %v165 = vpop.permute.xlu0 %164
    %v167 = vadd.f32 %v162, %v165
    %vm168 = vcmp.ge.f32.partialorder %v167, 0.0
    %v169 = vmul.f32 %v167, 0.01
    %v170 = vsel %vm168, %v167, %v169
    %171 = vst [vmem:[%s3] sm:$0xff] %v170
  $region21: #{discriminator_node.1} parent=0 // pred_fallthru
    _
  // Predicated region
  $region22: #{discriminator_node.1} parent=0 // pred_check
    _
  $region23: #{discriminator_node.1} parent=0 // pred_check_branch
    %173 = sbr.rel (0) target = $region25
  $region24: #{discriminator_node.1} parent=0 // pred_region
    _
  $region25: #{discriminator_node.1} parent=0 // pred_fallthru
    _
  // Predicated region
  $region26: #{discriminator_node.1} parent=0 // pred_check
    _
  $region27: #{discriminator_node.1} parent=0 // pred_check_branch
    %175 = sbr.rel (0) target = $region29
  $region28: #{discriminator_node.1} parent=0 // pred_region
    _
  $region29: #{discriminator_node.1} parent=0 // pred_fallthru
    _

</llo_original>
